<compile_context>
chip_gen: v5e
topology: v5e:2x2
jax: 0.10.0
libtpu: 0.0.40
codegen_flags: <defaults>
</compile_context>

<pallas_src>
import functools

import jax
import jax.numpy as jnp
from jax.experimental import pallas as pl
from jax.experimental.pallas import tpu as pltpu

EPS = 1e-6        # added to the vector norm (module-level EPS)
LN_EPS = 1e-5     # nn.LayerNorm default eps
_MAX_TP = 8192    # lane-tile cap (review: >2048 so small-F blocks stay >= a few MiB)


def _vn_layernorm_kernel(x_ref, gamma_ref, beta_ref, o_ref):
    # x_ref / o_ref: (1, 3F, TP) dense blocks (row r = feature r//3, component r%3).
    # gamma_ref / beta_ref: (3F, 1) with each per-feature value repeated 3x.
    f3 = x_ref.shape[1]
    x = x_ref[0].astype(jnp.float32)                       # (3F, TP)

    # Squared norm of every 3-vector, replicated onto all 3 component rows.
    # Stage 1: sum of {row-1, row, row+1} is the correct group sum at the
    #          middle row (r % 3 == 1) of each group, regardless of roll sign.
    sq = x * x
    nb = pltpu.roll(sq, shift=1, axis=0) + pltpu.roll(sq, shift=f3 - 1, axis=0)
    mid = sq + nb                                          # valid where r % 3 == 1
    row = jax.lax.broadcasted_iota(jnp.int32, (f3, 1), 0)
    gm = jnp.where((row % 3) == 1, mid, 0.0)               # keep middle rows only
    # Stage 2: spread the middle-row value to both neighbours (again symmetric).
    nsq = gm + pltpu.roll(gm, shift=1, axis=0) + pltpu.roll(gm, shift=f3 - 1, axis=0)

    norm = jnp.sqrt(nsq) + EPS                             # (3F, TP), replicated 3x

    # LayerNorm over the feature axis, per (batch, point).  Every feature's
    # norm appears exactly 3 times in the 3F rows, so mean/var over the 3F
    # replicated rows equal the per-feature statistics.  Single fused pass.
    mean = jnp.mean(norm, axis=0, keepdims=True)           # (1, TP)
    mean_sq = jnp.mean(norm * norm, axis=0, keepdims=True)
    var = jnp.maximum(mean_sq - mean * mean, 0.0)          # biased variance (torch LN)
    inv_std = jax.lax.rsqrt(var + LN_EPS)
    norm_ln = (norm - mean) * inv_std * gamma_ref[...] + beta_ref[...]

    # x / norm * norm_ln -- exact divide (mem-bound kernel, so it is free).
    o_ref[0] = (x * (norm_ln / norm)).astype(o_ref.dtype)


def _vmem_limit_bytes():
    """Generation-aware scoped-VMEM limit (~0.4x physical; 64 MiB assumed if unknown)."""
    try:
        info = pltpu.get_tpu_info()
        phys = int(getattr(info, "vmem_capacity_bytes", 0)) or (64 << 20)
    except Exception:  # pragma: no cover - conservative fallback (v7x-sized)
        phys = 64 << 20
    return max(16 << 20, min(int(phys * 0.4), 96 << 20))


def _pick_tp(B, F3, P, io_itemsize, vmem_limit):
    """Largest lane tile (multiple of 128, <= _MAX_TP) fitting the VMEM budget,
    while keeping at least 2 grid steps so both v7x TensorCores get work."""
    lanes_total = pl.cdiv(P, 128) * 128
    if lanes_total <= 128:
        return P
    pack = max(1, 32 // io_itemsize)                 # sublane packing of the io dtype
    rows_io = pl.cdiv(F3, pack) * pack               # padded io rows (bf16 -> 16, i8 -> 32)
    rows_f32 = pl.cdiv(F3, 8) * 8                    # padded rows of in-kernel f32 temps
    # Double-buffered input + output blocks plus ~6 live f32 temporaries, per lane.
    per_lane = 4 * rows_io * io_itemsize + 6 * rows_f32 * 4
    budget = int(vmem_limit * 0.6)                   # headroom for compiler scratch
    tp = (budget // per_lane) // 128 * 128
    tp = max(128, min(tp, _MAX_TP, lanes_total))
    # v7x has 2 TensorCores sharing HBM: keep B * cdiv(P, tp) >= 2 when possible.
    if B * pl.cdiv(P, tp) < 2:
        tp = max(128, min(tp, pl.cdiv(pl.cdiv(P, 2), 128) * 128))
    return tp


def _vn_layer_norm_flat(x2, gamma_rep, beta_rep, tp, vmem_limit):
    """x2: [B, 3F, P] (native layout, features*3 merged); gamma_rep/beta_rep: [3F, 1]."""
    B, F3, P = x2.shape
    grid = (B, pl.cdiv(P, tp))
    return pl.pallas_call(
        _vn_layernorm_kernel,
        out_shape=jax.ShapeDtypeStruct((B, F3, P), x2.dtype),
        grid=grid,
        in_specs=[
            pl.BlockSpec((1, F3, tp), lambda b, p: (b, 0, p)),
            pl.BlockSpec((F3, 1), lambda b, p: (0, 0)),
            pl.BlockSpec((F3, 1), lambda b, p: (0, 0)),
        ],
        out_specs=pl.BlockSpec((1, F3, tp), lambda b, p: (b, 0, p)),
        compiler_params=pltpu.CompilerParams(
            dimension_semantics=("parallel", "parallel"),
            vmem_limit_bytes=vmem_limit,
        ),
        # TODO(synk): on v5e sweep pipeline_mode=pl.Buffered(3) on the x specs if the
        # profile shows exposed DMA at small blocks (expected gain is only a few %).
    )(x2, gamma_rep, beta_rep)


@functools.partial(jax.jit, static_argnames=("tp",))
def vn_layer_norm(x, gamma, beta, tp=None):
    """Drop-in equivalent of the PyTorch module: x [B, F, 3, P] -> [B, F, 3, P].

    No transposes: [B, F, 3, P] -> [B, 3F, P] is a free contiguous reshape, so the
    only HBM traffic is the kernel's own 1x read + 1x write (works for f32 or bf16 x).
    """
    B, F, V, P = x.shape
    assert V == 3
    F3 = 3 * F
    vmem_limit = _vmem_limit_bytes()
    if tp is None:
        tp = _pick_tp(B, F3, P, jnp.dtype(x.dtype).itemsize, vmem_limit)

    x2 = x.reshape(B, F3, P)                                  # free (adjacent dims)
    gamma_rep = jnp.repeat(gamma.astype(jnp.float32), 3).reshape(F3, 1)
    beta_rep = jnp.repeat(beta.astype(jnp.float32), 3).reshape(F3, 1)

    out2 = _vn_layer_norm_flat(x2, gamma_rep, beta_rep, tp, vmem_limit)
    return out2.reshape(B, F, V, P)                           # free


def _reference(x, gamma, beta):
    # Pure-JAX reference mirroring the PyTorch forward.
    xf = x.astype(jnp.float32)
    norm = jnp.sqrt(jnp.sum(xf * xf, axis=2)) + EPS           # (B, F, P)
    nt = jnp.transpose(norm, (0, 2, 1))                       # (B, P, F)
    mean = jnp.mean(nt, axis=-1, keepdims=True)
    var = jnp.mean((nt - mean) ** 2, axis=-1, keepdims=True)
    nln = (nt - mean) / jnp.sqrt(var + LN_EPS) * gamma + beta
    norm_ln = jnp.transpose(nln, (0, 2, 1))                   # (B, F, P)
    return (xf / norm[:, :, None, :] * norm_ln[:, :, None, :]).astype(x.dtype)


if __name__ == "__main__":
    key = jax.random.PRNGKey(0)
    kx, kg, kb = jax.random.split(key, 3)

    B, F, P = 2, 16, 256
    x = jax.random.normal(kx, (B, F, 3, P), dtype=jnp.float32)
    # Non-trivial affine params to exercise the gamma/beta broadcast.
    gamma = 1.0 + 0.1 * jax.random.normal(kg, (F,), dtype=jnp.float32)
    beta = 0.05 * jax.random.normal(kb, (F,), dtype=jnp.float32)

    # tp=128 only to exercise the (B, P/TP) tiled grid at this small demo shape;
    # at production shapes _pick_tp chooses up to 8192-lane tiles automatically.
    out = jax.block_until_ready(vn_layer_norm(x, gamma, beta, tp=128))

    ref = _reference(x, gamma, beta)
    assert out.shape == x.shape and out.dtype == x.dtype
    assert jnp.allclose(out, ref, atol=5e-4, rtol=5e-4), "mismatch vs reference"

    print("KERNEL_OK")
</pallas_src>

<mosaic_0001>
module attributes {stable_mosaic.version = 11 : i64} {
  func.func @_vn_layernorm_kernel(%arg0: i32, %arg1: i32, %arg2: memref<1x48x128xf32, #tpu.memory_space<vmem>>, %arg3: memref<48x1xf32, #tpu.memory_space<vmem>>, %arg4: memref<48x1xf32, #tpu.memory_space<vmem>>, %arg5: memref<1x48x128xf32, #tpu.memory_space<vmem>>) attributes {dimension_semantics = [#tpu.dimension_semantics<parallel>, #tpu.dimension_semantics<parallel>], iteration_bounds = array<i64: 2, 2>, scalar_prefetch = 0 : i64, scratch_operands = 0 : i64, tpu.core_type = #tpu.core_type<tc>, window_params = [{transform_indices = @transform_0, window_bounds = array<i64: 1, 48, 128>}, {pipeline_mode = #tpu.pipeline_mode<synchronous>, transform_indices = @transform_1, window_bounds = array<i64: 48, 1>}, {pipeline_mode = #tpu.pipeline_mode<synchronous>, transform_indices = @transform_2, window_bounds = array<i64: 48, 1>}, {transform_indices = @transform_3, window_bounds = array<i64: 1, 48, 128>}]} {
    %c0 = arith.constant 0 : index
    %c0_0 = arith.constant 0 : index
    %c0_1 = arith.constant 0 : index
    %0 = vector.load %arg2[%c0, %c0_0, %c0_1] : memref<1x48x128xf32, #tpu.memory_space<vmem>>, vector<1x48x128xf32>
    %1 = vector.shape_cast %0 : vector<1x48x128xf32> to vector<48x128xf32>
    %2 = arith.mulf %1, %1 : vector<48x128xf32>
    %c1_i32 = arith.constant 1 : i32
    %3 = tpu.dynamic_rotate %2 by %c1_i32 dim 0 : vector<48x128xf32>, i32 -> vector<48x128xf32>
    %c47_i32 = arith.constant 47 : i32
    %4 = tpu.dynamic_rotate %2 by %c47_i32 dim 0 : vector<48x128xf32>, i32 -> vector<48x128xf32>
    %5 = arith.addf %3, %4 : vector<48x128xf32>
    %6 = arith.addf %2, %5 : vector<48x128xf32>
    %7 = tpu.iota {dimensions = array<i32: 0>} : vector<48x1xi32>
    %c3_i32 = arith.constant 3 : i32
    %c0_i32 = arith.constant 0 : i32
    %8 = arith.cmpi eq, %c3_i32, %c0_i32 : i32
    %c1_i32_2 = arith.constant 1 : i32
    %9 = arith.select %8, %c1_i32_2, %c3_i32 : i32
    %10 = vector.broadcast %9 : i32 to vector<48x1xi32>
    %11 = arith.remsi %7, %10 : vector<48x1xi32>
    %c0_i32_3 = arith.constant 0 : i32
    %12 = vector.broadcast %c0_i32_3 : i32 to vector<48x1xi32>
    %13 = arith.cmpi ne, %11, %12 : vector<48x1xi32>
    %c0_i32_4 = arith.constant 0 : i32
    %14 = vector.broadcast %c0_i32_4 : i32 to vector<48x1xi32>
    %15 = arith.cmpi slt, %11, %14 : vector<48x1xi32>
    %c0_i32_5 = arith.constant 0 : i32
    %16 = arith.cmpi slt, %9, %c0_i32_5 : i32
    %17 = vector.broadcast %16 : i1 to vector<48x1xi1>
    %18 = vector.broadcast %17 : vector<48x1xi1> to vector<48x1xi1>
    %19 = arith.xori %15, %18 : vector<48x1xi1>
    %20 = arith.andi %19, %13 : vector<48x1xi1>
    %21 = vector.broadcast %9 : i32 to vector<48x1xi32>
    %22 = arith.addi %11, %21 : vector<48x1xi32>
    %23 = arith.select %20, %22, %11 : vector<48x1xi1>, vector<48x1xi32>
    %c1_i32_6 = arith.constant 1 : i32
    %24 = vector.broadcast %c1_i32_6 : i32 to vector<48x1xi32>
    %25 = arith.cmpi eq, %23, %24 : vector<48x1xi32>
    %cst = arith.constant 0.000000e+00 : f32
    %26 = vector.shape_cast %25 : vector<48x1xi1> to vector<48x1xi1>
    %27 = vector.broadcast %26 : vector<48x1xi1> to vector<48x128xi1>
    %28 = vector.broadcast %cst : f32 to vector<48x128xf32>
    %29 = arith.select %27, %6, %28 : vector<48x128xi1>, vector<48x128xf32>
    %c1_i32_7 = arith.constant 1 : i32
    %30 = tpu.dynamic_rotate %29 by %c1_i32_7 dim 0 : vector<48x128xf32>, i32 -> vector<48x128xf32>
    %31 = arith.addf %29, %30 : vector<48x128xf32>
    %c47_i32_8 = arith.constant 47 : i32
    %32 = tpu.dynamic_rotate %29 by %c47_i32_8 dim 0 : vector<48x128xf32>, i32 -> vector<48x128xf32>
    %33 = arith.addf %31, %32 : vector<48x128xf32>
    %34 = math.sqrt %33 : vector<48x128xf32>
    %cst_9 = arith.constant 9.99999997E-7 : f32
    %35 = vector.broadcast %cst_9 : f32 to vector<48x128xf32>
    %36 = arith.addf %34, %35 : vector<48x128xf32>
    %cst_10 = arith.constant dense<0.000000e+00> : vector<128xf32>
    %37 = vector.multi_reduction <add>, %36, %cst_10 [0] : vector<48x128xf32> to vector<128xf32>
    %38 = vector.shape_cast %37 : vector<128xf32> to vector<1x128xf32>
    %cst_11 = arith.constant 4.800000e+01 : f32
    %39 = vector.broadcast %cst_11 : f32 to vector<1x128xf32>
    %40 = arith.divf %38, %39 : vector<1x128xf32>
    %41 = arith.mulf %36, %36 : vector<48x128xf32>
    %cst_12 = arith.constant dense<0.000000e+00> : vector<128xf32>
    %42 = vector.multi_reduction <add>, %41, %cst_12 [0] : vector<48x128xf32> to vector<128xf32>
    %43 = vector.shape_cast %42 : vector<128xf32> to vector<1x128xf32>
    %cst_13 = arith.constant 4.800000e+01 : f32
    %44 = vector.broadcast %cst_13 : f32 to vector<1x128xf32>
    %45 = arith.divf %43, %44 : vector<1x128xf32>
    %46 = arith.mulf %40, %40 : vector<1x128xf32>
    %47 = arith.subf %45, %46 : vector<1x128xf32>
    %cst_14 = arith.constant 0.000000e+00 : f32
    %48 = vector.broadcast %cst_14 : f32 to vector<1x128xf32>
    %49 = arith.maximumf %47, %48 : vector<1x128xf32>
    %cst_15 = arith.constant 9.99999974E-6 : f32
    %50 = vector.broadcast %cst_15 : f32 to vector<1x128xf32>
    %51 = arith.addf %49, %50 : vector<1x128xf32>
    %52 = math.rsqrt %51 : vector<1x128xf32>
    %53 = vector.broadcast %40 : vector<1x128xf32> to vector<48x128xf32>
    %54 = arith.subf %36, %53 : vector<48x128xf32>
    %55 = vector.broadcast %52 : vector<1x128xf32> to vector<48x128xf32>
    %56 = arith.mulf %54, %55 : vector<48x128xf32>
    %c0_16 = arith.constant 0 : index
    %c0_17 = arith.constant 0 : index
    %57 = vector.load %arg3[%c0_16, %c0_17] : memref<48x1xf32, #tpu.memory_space<vmem>>, vector<48x1xf32>
    %58 = vector.broadcast %57 : vector<48x1xf32> to vector<48x128xf32>
    %59 = arith.mulf %56, %58 : vector<48x128xf32>
    %c0_18 = arith.constant 0 : index
    %c0_19 = arith.constant 0 : index
    %60 = vector.load %arg4[%c0_18, %c0_19] : memref<48x1xf32, #tpu.memory_space<vmem>>, vector<48x1xf32>
    %61 = vector.broadcast %60 : vector<48x1xf32> to vector<48x128xf32>
    %62 = arith.addf %59, %61 : vector<48x128xf32>
    %63 = arith.divf %62, %36 : vector<48x128xf32>
    %64 = arith.mulf %1, %63 : vector<48x128xf32>
    %c0_20 = arith.constant 0 : index
    %c0_21 = arith.constant 0 : index
    %c0_22 = arith.constant 0 : index
    %65 = vector.load %arg5[%c0_20, %c0_21, %c0_22] : memref<1x48x128xf32, #tpu.memory_space<vmem>>, vector<1x48x128xf32>
    %66 = vector.shape_cast %65 : vector<1x48x128xf32> to vector<48x128xf32>
    %67 = vector.shape_cast %64 : vector<48x128xf32> to vector<1x48x128xf32>
    tpu.vector_store %arg5[%c0_20, %c0_21, %c0_22], %67 {strides = array<i32>} : memref<1x48x128xf32, #tpu.memory_space<vmem>>, vector<1x48x128xf32>,
    return
  }
  func.func @transform_0(%arg0: i32, %arg1: i32) -> (i32, i32, i32) {
    %c0_i32 = arith.constant 0 : i32
    %c0_i32_0 = arith.constant 0 : i32
    return %arg0, %c0_i32, %arg1 : i32, i32, i32
  }
  func.func @transform_1(%arg0: i32, %arg1: i32) -> (i32, i32) {
    %c0_i32 = arith.constant 0 : i32
    %c0_i32_0 = arith.constant 0 : i32
    %c0_i32_1 = arith.constant 0 : i32
    return %c0_i32, %c0_i32_0 : i32, i32
  }
  func.func @transform_2(%arg0: i32, %arg1: i32) -> (i32, i32) {
    %c0_i32 = arith.constant 0 : i32
    %c0_i32_0 = arith.constant 0 : i32
    %c0_i32_1 = arith.constant 0 : i32
    return %c0_i32, %c0_i32_0 : i32, i32
  }
  func.func @transform_3(%arg0: i32, %arg1: i32) -> (i32, i32, i32) {
    %c0_i32 = arith.constant 0 : i32
    %c0_i32_0 = arith.constant 0 : i32
    return %arg0, %c0_i32, %arg1 : i32, i32, i32
  }
}

</mosaic_0001>

<llo_original>
// kernel: vn_layer_norm.1
$region0: #{vn_layer_norm.1}
  #allocation0 [shape = 'u32[]', space=smem, size = 0x4, offset = 0x4, fixed_abs, tag = 'smem constant byte address 0x4 - core index']
  #allocation1 [shape = 'u32[72,128]{1,0:T(1,128)}', space=vmem, size = 0x9000, scoped, tag = 'internal scratch']
  %s0 = inlined_call_operand.vmem [shape: f32[2,48,256], index: 0, kind: input, shape index: {}]
  %s1 = inlined_call_operand.vmem [shape: f32[48,1], index: 1, kind: input, shape index: {}]
  %s2 = inlined_call_operand.vmem [shape: f32[48,1], index: 2, kind: input, shape index: {}]
  %s3 = inlined_call_operand.vmem [shape: f32[2,48,256], index: 3, kind: output, shape index: {}]
  %s4 = sld [smem:[#allocation0]]
  $region117: #{vn_layer_norm.1} parent=0
    _
  %s6 = ssub.s32 1, %s4
  %s7 = scalar_select 0, %s6, %s4
  $region1: #{vn_layer_norm.1} parent=0
    #allocation2 [shape = 'u8[49152]{0}', space=vmem, size = 0xc000, scoped, tag = 'input window, operand 0']
    #allocation3 [shape = 'u8[49152]{0}', space=vmem, size = 0xc000, scoped, tag = 'output window, operand 0']
    loop: start=0, step=1, limit=6
    $region2: #{vn_layer_norm.1} parent=1 // loop_pre_header
      _
    $region3: #{vn_layer_norm.1} parent=1 // loop_header
      %s9 = sphi 0, %s13
      %p10 = scmp.ge.s32.totalorder %s9, 6
      %s16 = sphi 0, %s28
      %s17 = sphi 0, %s24
      %s18 = sphi 0, %s16
      %s19 = sphi 0, %s17
      %s20 = sphi 0, %s18
      %s21 = sphi 0, %s19
      %s33 = sphi 0, %s35
      %s36 = sphi 0, %s33
      %s37 = sphi 0, %s36
      %s53 = sphi 0, %s37
      %s57 = sphi 0, %s57
      %s59 = sphi 0, %s57
      %s60 = sphi 0, %s59
      %s74 = sphi 0, %s60
      %s78 = sphi 0, %s78
      %s80 = sphi 0, %s78
      %s81 = sphi 0, %s80
      %s95 = sphi 0, %s81
      %s103 = sphi 0, %s105
      %s106 = sphi 0, %s103
      %s107 = sphi 0, %s106
      %s123 = sphi 0, %s107
    $region4: #{vn_layer_norm.1} parent=1 // loop_header_branch
      %12 = sbr.rel (%p10) target = $region8
    $region5: #{vn_layer_norm.1} parent=1 // loop_body
      %s14 = ssub.s32 %s9, 1
      %s15 = ssub.s32 %s9, 2
      %s22 = sadd.s32 1, %s17
      %p23 = scmp.ge.s32.totalorder %s22, 2
      %s24 = scalar_select %p23, 0, %s22
      %s25 = sadd.s32 1, %s16
      %s26 = scalar_select %p23, %s25, %s16
      %p27 = scmp.ge.s32.totalorder %s26, 2
      %s28 = scalar_select %p27, 0, %s26
      %s29 = ssub.s32 %s16, %s28
      %s30 = ssub.s32 %s17, %s24
      %s31 = sor.u32 %s29, %s30
      %p32 = scmp.eq.s32.totalorder %s31, 0
      %s34 = sadd.s32 %s33, 1
      %s35 = scalar_select %p32, %s33, %s34
      %p38 = pneg %p32
      %p39 = scmp.eq.s32.totalorder %s9, 3
      %p40 = por %p38, %p39
      %p41 = scmp.ne.s32.totalorder %s33, %s36
      %p42 = scmp.eq.s32.totalorder %s9, 0
      %p43 = por %p41, %p42
      %p44 = scmp.ne.s32.totalorder %s33, %s36
      %p45 = scmp.eq.s32.totalorder %s14, 3
      %p46 = por %p44, %p45
      %p47 = scmp.ne.s32.totalorder %s36, %s37
      %p48 = scmp.eq.s32.totalorder %s14, 0
      %p49 = por %p47, %p48
      %p50 = scmp.ne.s32.totalorder %s36, %s37
      %p51 = scmp.eq.s32.totalorder %s15, 3
      %p52 = por %p50, %p51
      %p54 = scmp.ne.s32.totalorder %s37, %s53
      %p55 = scmp.eq.s32.totalorder %s15, 0
      %p56 = por %p54, %p55
      %s58 = sadd.s32 %s57, 1
      %p61 = scmp.eq.s32.totalorder %s9, 3
      %p62 = scmp.ne.s32.totalorder %s57, %s59
      %p63 = scmp.eq.s32.totalorder %s9, 0
      %p64 = por %p62, %p63
      %p65 = scmp.ne.s32.totalorder %s57, %s59
      %p66 = scmp.eq.s32.totalorder %s14, 3
      %p67 = por %p65, %p66
      %p68 = scmp.ne.s32.totalorder %s59, %s60
      %p69 = scmp.eq.s32.totalorder %s14, 0
      %p70 = por %p68, %p69
      %p71 = scmp.ne.s32.totalorder %s59, %s60
      %p72 = scmp.eq.s32.totalorder %s15, 3
      %p73 = por %p71, %p72
      %p75 = scmp.ne.s32.totalorder %s60, %s74
      %p76 = scmp.eq.s32.totalorder %s15, 0
      %p77 = por %p75, %p76
      %s79 = sadd.s32 %s78, 1
      %p82 = scmp.eq.s32.totalorder %s9, 3
      %p83 = scmp.ne.s32.totalorder %s78, %s80
      %p84 = scmp.eq.s32.totalorder %s9, 0
      %p85 = por %p83, %p84
      %p86 = scmp.ne.s32.totalorder %s78, %s80
      %p87 = scmp.eq.s32.totalorder %s14, 3
      %p88 = por %p86, %p87
      %p89 = scmp.ne.s32.totalorder %s80, %s81
      %p90 = scmp.eq.s32.totalorder %s14, 0
      %p91 = por %p89, %p90
      %p92 = scmp.ne.s32.totalorder %s80, %s81
      %p93 = scmp.eq.s32.totalorder %s15, 3
      %p94 = por %p92, %p93
      %p96 = scmp.ne.s32.totalorder %s81, %s95
      %p97 = scmp.eq.s32.totalorder %s15, 0
      %p98 = por %p96, %p97
      %s99 = ssub.s32 %s16, %s28
      %s100 = ssub.s32 %s17, %s24
      %s101 = sor.u32 %s99, %s100
      %p102 = scmp.eq.s32.totalorder %s101, 0
      %s104 = sadd.s32 %s103, 1
      %s105 = scalar_select %p102, %s103, %s104
      %p108 = pneg %p102
      %p109 = scmp.eq.s32.totalorder %s9, 3
      %p110 = por %p108, %p109
      %p111 = scmp.ne.s32.totalorder %s103, %s106
      %p112 = scmp.eq.s32.totalorder %s9, 0
      %p113 = por %p111, %p112
      %p114 = scmp.ne.s32.totalorder %s103, %s106
      %p115 = scmp.eq.s32.totalorder %s14, 3
      %p116 = por %p114, %p115
      %p117 = scmp.ne.s32.totalorder %s106, %s107
      %p118 = scmp.eq.s32.totalorder %s14, 0
      %p119 = por %p117, %p118
      %p120 = scmp.ne.s32.totalorder %s106, %s107
      %p121 = scmp.eq.s32.totalorder %s15, 3
      %p122 = por %p120, %p121
      %p124 = scmp.ne.s32.totalorder %s107, %s123
      %p125 = scmp.eq.s32.totalorder %s15, 0
      %p126 = por %p124, %p125
      %p127 = scmp.le.s32.totalorder 1, %s9
      %p128 = scmp.lt.s32.totalorder %s9, 5
      %p129 = pnand %p127, %p128
      %p130 = pneg %p129
      // Predicated region
      $region9: #{vn_layer_norm.1} parent=5 // pred_check
        _
      $region10: #{vn_layer_norm.1} parent=5 // pred_check_branch
        %132 = sbr.rel (%p129) target = $region12
      $region11: #{vn_layer_norm.1} parent=5 // pred_region
        %s133 = ssub.s32 %s9, 1
        // Predicated region
        $region13: #{vn_layer_norm.1} parent=11 // pred_check
          %p134 = pneg %p70
        $region14: #{vn_layer_norm.1} parent=11 // pred_check_branch
          %136 = sbr.rel (%p134) target = $region16
        $region15: #{vn_layer_norm.1} parent=11 // pred_region
          _
        $region16: #{vn_layer_norm.1} parent=11 // pred_fallthru
          _
        // Predicated region
        $region17: #{vn_layer_norm.1} parent=11 // pred_check
          %p137 = pneg %p91
        $region18: #{vn_layer_norm.1} parent=11 // pred_check_branch
          %139 = sbr.rel (%p137) target = $region20
        $region19: #{vn_layer_norm.1} parent=11 // pred_region
          _
        $region20: #{vn_layer_norm.1} parent=11 // pred_fallthru
          _
      $region12: #{vn_layer_norm.1} parent=5 // pred_fallthru
        _
      %p140 = scmp.lt.s32.totalorder %s9, 4
      // Predicated region
      $region21: #{vn_layer_norm.1} parent=5 // pred_check
        %p141 = pneg %p140
      $region22: #{vn_layer_norm.1} parent=5 // pred_check_branch
        %143 = sbr.rel (%p141) target = $region24
      $region23: #{vn_layer_norm.1} parent=5 // pred_region
        // Predicated region
        $region25: #{vn_layer_norm.1} parent=23 // pred_check
          %p144 = pneg %p43
        $region26: #{vn_layer_norm.1} parent=23 // pred_check_branch
          %146 = sbr.rel (%p144) target = $region28
        $region27: #{vn_layer_norm.1} parent=23 // pred_region
          %s147 = sand.u32 %s33, 1
          %s148 = sand.u32 %s33, 1
          %s149 = smul.addr %s148, 48
          %s150 = scalar_lea.vmem [#allocation2], %s149
          %s151 = smul.addr %s16, 12
          %s152 = sadd.s32 %s17, %s151
          %s153 = smul.addr %s152, 8
          %s154 = scalar_lea.vmem %s0, %s153
          // Predicated region
          $region29: #{vn_layer_norm.1} parent=27 // pred_check
            _
          $region30: #{vn_layer_norm.1} parent=27 // pred_check_branch
            %156 = sbr.rel (0) target = $region32
          $region31: #{vn_layer_norm.1} parent=27 // pred_region
            // Predicated region
            $region33: #{vn_layer_norm.1} parent=31 // pred_check
              _
            $region34: #{vn_layer_norm.1} parent=31 // pred_check_branch
              %158 = sbr.rel (0) target = $region36
            $region35: #{vn_layer_norm.1} parent=31 // pred_region
              // Predicated region
              $region48: #{vn_layer_norm.1} parent=35 // pred_check
                _
              $region49: #{vn_layer_norm.1} parent=35 // pred_check_branch
                %184 = sbr.rel (0) target = $region51
              $region50: #{vn_layer_norm.1} parent=35 // pred_region
                loop: start=0, step=1, limit=1
                $region52: #{vn_layer_norm.1} parent=50 // loop_pre_header
                  _
                $region53: #{vn_layer_norm.1} parent=50 // loop_header
                  %s186 = sphi 0, %s190
                  %p187 = scmp.ge.s32.totalorder %s186, 1
                  %s191 = sphi %s154, %s154
                  %s192 = sphi %s150, %s150
                $region54: #{vn_layer_norm.1} parent=50 // loop_header_branch
                  %189 = sbr.rel (%p187) target = $region58
                $region55: #{vn_layer_norm.1} parent=50 // loop_body
                  %v193 = vld [vmem:[%s191] sm:$0xff]
                  %194 = vst [vmem:[%s192] sm:$0xff] %v193
                  %v195 = vld [vmem:[%s191 + $0x10] sm:$0xff]
                  %196 = vst [vmem:[%s192 + $0x8] sm:$0xff] %v195
                  %v197 = vld [vmem:[%s191 + $0x20] sm:$0xff]
                  %198 = vst [vmem:[%s192 + $0x10] sm:$0xff] %v197
                  %v199 = vld [vmem:[%s191 + $0x30] sm:$0xff]
                  %200 = vst [vmem:[%s192 + $0x18] sm:$0xff] %v199
                  %v201 = vld [vmem:[%s191 + $0x40] sm:$0xff]
                  %202 = vst [vmem:[%s192 + $0x20] sm:$0xff] %v201
                  %v203 = vld [vmem:[%s191 + $0x50] sm:$0xff]
                  %204 = vst [vmem:[%s192 + $0x28] sm:$0xff] %v203
                $region56: #{vn_layer_norm.1} parent=50 // loop_footer
                  %s190 = sadd.s32 1, %s186
                $region57: #{vn_layer_norm.1} parent=50 // loop_footer_branch
                  %185 = sbr.rel target = $region53
                $region58: #{vn_layer_norm.1} parent=50 // loop_exit
                  _
              $region51: #{vn_layer_norm.1} parent=35 // pred_fallthru
                _
              // Predicated region
              $region59: #{vn_layer_norm.1} parent=35 // pred_check
                _
              $region60: #{vn_layer_norm.1} parent=35 // pred_check_branch
                %206 = sbr.rel target = $region62
              $region61: #{vn_layer_norm.1} parent=35 // pred_region
                _
              $region62: #{vn_layer_norm.1} parent=35 // pred_fallthru
                _
            $region36: #{vn_layer_norm.1} parent=31 // pred_fallthru
              _
            // Predicated region
            $region37: #{vn_layer_norm.1} parent=31 // pred_check
              _
            $region38: #{vn_layer_norm.1} parent=31 // pred_check_branch
              %160 = sbr.rel target = $region40
            $region39: #{vn_layer_norm.1} parent=31 // pred_region
              %s162 = ssub.s32 256, 1
              loop: start=0, step=1, limit=1
              $region41: #{vn_layer_norm.1} parent=39 // loop_pre_header
                _
              $region42: #{vn_layer_norm.1} parent=39 // loop_header
                %s164 = sphi 0, %s168
                %p165 = scmp.ge.s32.totalorder %s164, 1
                %s169 = sphi %s154, %s154
                %s170 = sphi %s150, %s150
              $region43: #{vn_layer_norm.1} parent=39 // loop_header_branch
                %167 = sbr.rel (%p165) target = $region47
              $region44: #{vn_layer_norm.1} parent=39 // loop_body
                %v171 = vld [vmem:[%s169] sm:%s162]
                %172 = vst [vmem:[%s170] sm:%s162] %v171
                %v173 = vld [vmem:[%s169 + $0x10] sm:%s162]
                %174 = vst [vmem:[%s170 + $0x8] sm:%s162] %v173
                %v175 = vld [vmem:[%s169 + $0x20] sm:%s162]
                %176 = vst [vmem:[%s170 + $0x10] sm:%s162] %v175
                %v177 = vld [vmem:[%s169 + $0x30] sm:%s162]
                %178 = vst [vmem:[%s170 + $0x18] sm:%s162] %v177
                %v179 = vld [vmem:[%s169 + $0x40] sm:%s162]
                %180 = vst [vmem:[%s170 + $0x20] sm:%s162] %v179
                %v181 = vld [vmem:[%s169 + $0x50] sm:%s162]
                %182 = vst [vmem:[%s170 + $0x28] sm:%s162] %v181
              $region45: #{vn_layer_norm.1} parent=39 // loop_footer
                %s168 = sadd.s32 1, %s164
              $region46: #{vn_layer_norm.1} parent=39 // loop_footer_branch
                %163 = sbr.rel target = $region42
              $region47: #{vn_layer_norm.1} parent=39 // loop_exit
                _
            $region40: #{vn_layer_norm.1} parent=31 // pred_fallthru
              _
          $region32: #{vn_layer_norm.1} parent=27 // pred_fallthru
            _
          %207 = vnop
        $region28: #{vn_layer_norm.1} parent=23 // pred_fallthru
          _
      $region24: #{vn_layer_norm.1} parent=5 // pred_fallthru
        _
      %p208 = scmp.le.s32.totalorder 1, %s9
      %p209 = scmp.lt.s32.totalorder %s9, 5
      %p210 = pnand %p208, %p209
      %p211 = pneg %p210
      // Predicated region
      $region63: #{vn_layer_norm.1} parent=5 // pred_check
        _
      $region64: #{vn_layer_norm.1} parent=5 // pred_check_branch
        %213 = sbr.rel (%p210) target = $region66
      $region65: #{vn_layer_norm.1} parent=5 // pred_region
        %s214 = ssub.s32 %s9, 1
        %s215 = sand.u32 %s36, 1
        %s216 = sand.u32 %s36, 1
        %s217 = smul.addr %s216, 48
        %s218 = scalar_lea.vmem [#allocation2], %s217
        // Predicated region
        $region67: #{vn_layer_norm.1} parent=65 // pred_check
          %p219 = pneg %p49
        $region68: #{vn_layer_norm.1} parent=65 // pred_check_branch
          %221 = sbr.rel (%p219) target = $region70
        $region69: #{vn_layer_norm.1} parent=65 // pred_region
          _
        $region70: #{vn_layer_norm.1} parent=65 // pred_fallthru
          _
        %s222 = sand.u32 %s36, 1
        %s223 = sand.u32 %s36, 1
        %s224 = smul.addr %s223, 48
        %s225 = scalar_lea.vmem [#allocation2], %s224
        %p226 = pneg %p49
        %p227 = pneg %p46
        %p228 = pneg %p70
        %p229 = pneg %p67
        %p230 = pneg %p91
        %p231 = pneg %p88
        %p232 = pneg %p119
        %p233 = pneg %p116
        %s234 = sand.u32 %s106, 1
        %s235 = sand.u32 %s106, 1
        %s236 = smul.addr %s235, 48
        %s237 = scalar_lea.vmem [#allocation3], %s236
        %v238 = vld [vmem:[%s218] sm:$0xff]
        %v239 = vld [vmem:[%s218 + $0x8] sm:$0xff]
        %v240 = vld [vmem:[%s218 + $0x10] sm:$0xff]
        %v241 = vld [vmem:[%s218 + $0x18] sm:$0xff]
        %v242 = vld [vmem:[%s218 + $0x20] sm:$0xff]
        %v243 = vld [vmem:[%s218 + $0x28] sm:$0xff]
        %v244 = vmul.f32 %v238, %v238
        %v245 = vmul.f32 %v239, %v239
        %v246 = vmul.f32 %v240, %v240
        %v247 = vmul.f32 %v241, %v241
        %v248 = vmul.f32 %v242, %v242
        %v249 = vmul.f32 %v243, %v243
        %v250 = vrot.slane %v244, 7
        %v251 = vrot.slane %v245, 7
        %v252 = vrot.slane %v246, 7
        %v253 = vrot.slane %v247, 7
        %v254 = vrot.slane %v248, 7
        %v255 = vrot.slane %v249, 7
        %v256 = vlaneseq
        %v257 = vshrl.u32 %v256, 7
        %vm258 = vcmp.lt.s32.totalorder %v257, 1
        %v259 = vsel %vm258, %v254, %v255
        %v260 = vsel %vm258, %v253, %v254
        %v261 = vsel %vm258, %v252, %v253
        %v262 = vsel %vm258, %v251, %v252
        %v263 = vsel %vm258, %v250, %v251
        %v264 = vsel %vm258, %v255, %v250
        %v265 = vrot.slane %v244, 1
        %v266 = vrot.slane %v245, 1
        %v267 = vrot.slane %v246, 1
        %v268 = vrot.slane %v247, 1
        %v269 = vrot.slane %v248, 1
        %v270 = vrot.slane %v249, 1
        %vm271 = vcmp.lt.s32.totalorder %v257, 7
        %v272 = vsel %vm271, %v269, %v270
        %v273 = vsel %vm271, %v268, %v269
        %v274 = vsel %vm271, %v267, %v268
        %v275 = vsel %vm271, %v266, %v267
        %v276 = vsel %vm271, %v265, %v266
        %v277 = vsel %vm271, %v270, %v265
        %v278 = vadd.f32 %v264, %v276
        %v279 = vadd.f32 %v263, %v275
        %v280 = vadd.f32 %v262, %v274
        %v281 = vadd.f32 %v261, %v273
        %v282 = vadd.f32 %v260, %v272
        %v283 = vadd.f32 %v259, %v277
        %v284 = vadd.f32 %v244, %v278
        %v285 = vadd.f32 %v245, %v279
        %v286 = vadd.f32 %v246, %v280
        %v287 = vadd.f32 %v247, %v281
        %v288 = vadd.f32 %v248, %v282
        %v289 = vadd.f32 %v249, %v283
        %v290 = vadd.s32 %v257, 8
        %v291 = vadd.s32 %v257, 16
        %v292 = vadd.s32 %v257, 24
        %v293 = vadd.s32 %v257, 32
        %v294 = vadd.s32 %v257, 40
        %vm295 = vcmp.lt.s32.totalorder %v257, 0
        %v296 = vsub.s32 0, %v257
        %v297 = vsel %vm295, %v296, %v257
        %v298 = vand.u32 %v297, 65535
        %v299 = vshrl.u32 %v297, 16
        %v301 = vmul.u32 %v298, 43691
        %v302 = vmul.u32 %v298, 43690
        %v303 = vmul.u32 %v299, 43691
        %v304 = vmul.u32 %v299, 43690
        %v305 = vshll.u32 %v302, 16
        %v306 = vshrl.u32 %v302, 16
        %v307 = vshll.u32 %v303, 16
        %v308 = vshrl.u32 %v303, 16
        %vm309 = vc.u32 %v301, %v305
        %v310 = vsel %vm309, 1, 0
        %v311 = vadd.s32 %v301, %v305
        %v312 = vadd.s32 %v304, %v310
        %vm313 = vc.u32 %v311, %v307
        %v314 = vsel %vm313, 1, 0
        %v315 = vadd.s32 %v311, %v307
        %v316 = vadd.s32 %v312, %v314
        %v317 = vadd.s32 %v316, %v306
        %v318 = vadd.s32 %v317, %v308
        %v319 = vshrl.u32 %v318, 1
        %v320 = vmul.u32 %v319, 3
        %v321 = vsub.s32 %v297, %v320
        %v322 = vsub.s32 0, %v321
        %v323 = vsel %vm295, %v322, %v321
        %vm324 = vcmp.lt.s32.totalorder %v290, 0
        %v325 = vsub.s32 0, %v290
        %v326 = vsel %vm324, %v325, %v290
        %v327 = vand.u32 %v326, 65535
        %v328 = vshrl.u32 %v326, 16
        %v330 = vmul.u32 %v327, 43691
        %v331 = vmul.u32 %v327, 43690
        %v332 = vmul.u32 %v328, 43691
        %v333 = vmul.u32 %v328, 43690
        %v334 = vshll.u32 %v331, 16
        %v335 = vshrl.u32 %v331, 16
        %v336 = vshll.u32 %v332, 16
        %v337 = vshrl.u32 %v332, 16
        %vm338 = vc.u32 %v330, %v334
        %v339 = vsel %vm338, 1, 0
        %v340 = vadd.s32 %v330, %v334
        %v341 = vadd.s32 %v333, %v339
        %vm342 = vc.u32 %v340, %v336
        %v343 = vsel %vm342, 1, 0
        %v344 = vadd.s32 %v340, %v336
        %v345 = vadd.s32 %v341, %v343
        %v346 = vadd.s32 %v345, %v335
        %v347 = vadd.s32 %v346, %v337
        %v348 = vshrl.u32 %v347, 1
        %v349 = vmul.u32 %v348, 3
        %v350 = vsub.s32 %v326, %v349
        %v351 = vsub.s32 0, %v350
        %v352 = vsel %vm324, %v351, %v350
        %vm353 = vcmp.lt.s32.totalorder %v291, 0
        %v354 = vsub.s32 0, %v291
        %v355 = vsel %vm353, %v354, %v291
        %v356 = vand.u32 %v355, 65535
        %v357 = vshrl.u32 %v355, 16
        %v359 = vmul.u32 %v356, 43691
        %v360 = vmul.u32 %v356, 43690
        %v361 = vmul.u32 %v357, 43691
        %v362 = vmul.u32 %v357, 43690
        %v363 = vshll.u32 %v360, 16
        %v364 = vshrl.u32 %v360, 16
        %v365 = vshll.u32 %v361, 16
        %v366 = vshrl.u32 %v361, 16
        %vm367 = vc.u32 %v359, %v363
        %v368 = vsel %vm367, 1, 0
        %v369 = vadd.s32 %v359, %v363
        %v370 = vadd.s32 %v362, %v368
        %vm371 = vc.u32 %v369, %v365
        %v372 = vsel %vm371, 1, 0
        %v373 = vadd.s32 %v369, %v365
        %v374 = vadd.s32 %v370, %v372
        %v375 = vadd.s32 %v374, %v364
        %v376 = vadd.s32 %v375, %v366
        %v377 = vshrl.u32 %v376, 1
        %v378 = vmul.u32 %v377, 3
        %v379 = vsub.s32 %v355, %v378
        %v380 = vsub.s32 0, %v379
        %v381 = vsel %vm353, %v380, %v379
        %vm382 = vcmp.lt.s32.totalorder %v292, 0
        %v383 = vsub.s32 0, %v292
        %v384 = vsel %vm382, %v383, %v292
        %v385 = vand.u32 %v384, 65535
        %v386 = vshrl.u32 %v384, 16
        %v388 = vmul.u32 %v385, 43691
        %v389 = vmul.u32 %v385, 43690
        %v390 = vmul.u32 %v386, 43691
        %v391 = vmul.u32 %v386, 43690
        %v392 = vshll.u32 %v389, 16
        %v393 = vshrl.u32 %v389, 16
        %v394 = vshll.u32 %v390, 16
        %v395 = vshrl.u32 %v390, 16
        %vm396 = vc.u32 %v388, %v392
        %v397 = vsel %vm396, 1, 0
        %v398 = vadd.s32 %v388, %v392
        %v399 = vadd.s32 %v391, %v397
        %vm400 = vc.u32 %v398, %v394
        %v401 = vsel %vm400, 1, 0
        %v402 = vadd.s32 %v398, %v394
        %v403 = vadd.s32 %v399, %v401
        %v404 = vadd.s32 %v403, %v393
        %v405 = vadd.s32 %v404, %v395
        %v406 = vshrl.u32 %v405, 1
        %v407 = vmul.u32 %v406, 3
        %v408 = vsub.s32 %v384, %v407
        %v409 = vsub.s32 0, %v408
        %v410 = vsel %vm382, %v409, %v408
        %vm411 = vcmp.lt.s32.totalorder %v293, 0
        %v412 = vsub.s32 0, %v293
        %v413 = vsel %vm411, %v412, %v293
        %v414 = vand.u32 %v413, 65535
        %v415 = vshrl.u32 %v413, 16
        %v417 = vmul.u32 %v414, 43691
        %v418 = vmul.u32 %v414, 43690
        %v419 = vmul.u32 %v415, 43691
        %v420 = vmul.u32 %v415, 43690
        %v421 = vshll.u32 %v418, 16
        %v422 = vshrl.u32 %v418, 16
        %v423 = vshll.u32 %v419, 16
        %v424 = vshrl.u32 %v419, 16
        %vm425 = vc.u32 %v417, %v421
        %v426 = vsel %vm425, 1, 0
        %v427 = vadd.s32 %v417, %v421
        %v428 = vadd.s32 %v420, %v426
        %vm429 = vc.u32 %v427, %v423
        %v430 = vsel %vm429, 1, 0
        %v431 = vadd.s32 %v427, %v423
        %v432 = vadd.s32 %v428, %v430
        %v433 = vadd.s32 %v432, %v422
        %v434 = vadd.s32 %v433, %v424
        %v435 = vshrl.u32 %v434, 1
        %v436 = vmul.u32 %v435, 3
        %v437 = vsub.s32 %v413, %v436
        %v438 = vsub.s32 0, %v437
        %v439 = vsel %vm411, %v438, %v437
        %vm440 = vcmp.lt.s32.totalorder %v294, 0
        %v441 = vsub.s32 0, %v294
        %v442 = vsel %vm440, %v441, %v294
        %v443 = vand.u32 %v442, 65535
        %v444 = vshrl.u32 %v442, 16
        %v446 = vmul.u32 %v443, 43691
        %v447 = vmul.u32 %v443, 43690
        %v448 = vmul.u32 %v444, 43691
        %v449 = vmul.u32 %v444, 43690
        %v450 = vshll.u32 %v447, 16
        %v451 = vshrl.u32 %v447, 16
        %v452 = vshll.u32 %v448, 16
        %v453 = vshrl.u32 %v448, 16
        %vm454 = vc.u32 %v446, %v450
        %v455 = vsel %vm454, 1, 0
        %v456 = vadd.s32 %v446, %v450
        %v457 = vadd.s32 %v449, %v455
        %vm458 = vc.u32 %v456, %v452
        %v459 = vsel %vm458, 1, 0
        %v460 = vadd.s32 %v456, %v452
        %v461 = vadd.s32 %v457, %v459
        %v462 = vadd.s32 %v461, %v451
        %v463 = vadd.s32 %v462, %v453
        %v464 = vshrl.u32 %v463, 1
        %v465 = vmul.u32 %v464, 3
        %v466 = vsub.s32 %v442, %v465
        %v467 = vsub.s32 0, %v466
        %v468 = vsel %vm440, %v467, %v466
        %vm469 = vcmp.ne.s32.totalorder %v323, 0
        %vm470 = vcmp.ne.s32.totalorder %v352, 0
        %vm471 = vcmp.ne.s32.totalorder %v381, 0
        %vm472 = vcmp.ne.s32.totalorder %v410, 0
        %vm473 = vcmp.ne.s32.totalorder %v439, 0
        %vm474 = vcmp.ne.s32.totalorder %v468, 0
        %vm475 = vcmp.lt.s32.totalorder %v323, 0
        %vm476 = vcmp.lt.s32.totalorder %v352, 0
        %vm477 = vcmp.lt.s32.totalorder %v381, 0
        %vm478 = vcmp.lt.s32.totalorder %v410, 0
        %vm479 = vcmp.lt.s32.totalorder %v439, 0
        %vm480 = vcmp.lt.s32.totalorder %v468, 0
        %vm481 = vmand %vm475, %vm469
        %vm482 = vmand %vm476, %vm470
        %vm483 = vmand %vm477, %vm471
        %vm484 = vmand %vm478, %vm472
        %vm485 = vmand %vm479, %vm473
        %vm486 = vmand %vm480, %vm474
        %v487 = vadd.s32 %v323, 3
        %v488 = vadd.s32 %v352, 3
        %v489 = vadd.s32 %v381, 3
        %v490 = vadd.s32 %v410, 3
        %v491 = vadd.s32 %v439, 3
        %v492 = vadd.s32 %v468, 3
        %v493 = vsel %vm481, %v487, %v323
        %v494 = vsel %vm482, %v488, %v352
        %v495 = vsel %vm483, %v489, %v381
        %v496 = vsel %vm484, %v490, %v410
        %v497 = vsel %vm485, %v491, %v439
        %v498 = vsel %vm486, %v492, %v468
        %vm499 = vcmp.eq.s32.totalorder %v493, 1
        %vm500 = vcmp.eq.s32.totalorder %v494, 1
        %vm501 = vcmp.eq.s32.totalorder %v495, 1
        %vm502 = vcmp.eq.s32.totalorder %v496, 1
        %vm503 = vcmp.eq.s32.totalorder %v497, 1
        %vm504 = vcmp.eq.s32.totalorder %v498, 1
        %v505 = vsel %vm499, 1, 0
        %v506 = vsel %vm500, 1, 0
        %v507 = vsel %vm501, 1, 0
        %v508 = vsel %vm502, 1, 0
        %v509 = vsel %vm503, 1, 0
        %v510 = vsel %vm504, 1, 0
        %vm511 = vcmp.eq.s32.totalorder %v505, 1
        %vm512 = vcmp.eq.s32.totalorder %v506, 1
        %vm513 = vcmp.eq.s32.totalorder %v507, 1
        %vm514 = vcmp.eq.s32.totalorder %v508, 1
        %vm515 = vcmp.eq.s32.totalorder %v509, 1
        %vm516 = vcmp.eq.s32.totalorder %v510, 1
        %v517 = vsel %vm511, %v284, 0.0
        %v518 = vsel %vm512, %v285, 0.0
        %v519 = vsel %vm513, %v286, 0.0
        %v520 = vsel %vm514, %v287, 0.0
        %v521 = vsel %vm515, %v288, 0.0
        %v522 = vsel %vm516, %v289, 0.0
        %v523 = vrot.slane %v517, 7
        %v524 = vrot.slane %v518, 7
        %v525 = vrot.slane %v519, 7
        %v526 = vrot.slane %v520, 7
        %v527 = vrot.slane %v521, 7
        %v528 = vrot.slane %v522, 7
        %v529 = vsel %vm258, %v527, %v528
        %v530 = vsel %vm258, %v526, %v527
        %v531 = vsel %vm258, %v525, %v526
        %v532 = vsel %vm258, %v524, %v525
        %v533 = vsel %vm258, %v523, %v524
        %v534 = vsel %vm258, %v528, %v523
        %v535 = vadd.f32 %v517, %v534
        %v536 = vadd.f32 %v518, %v533
        %v537 = vadd.f32 %v519, %v532
        %v538 = vadd.f32 %v520, %v531
        %v539 = vadd.f32 %v521, %v530
        %v540 = vadd.f32 %v522, %v529
        %v541 = vrot.slane %v517, 1
        %v542 = vrot.slane %v518, 1
        %v543 = vrot.slane %v519, 1
        %v544 = vrot.slane %v520, 1
        %v545 = vrot.slane %v521, 1
        %v546 = vrot.slane %v522, 1
        %v547 = vsel %vm271, %v545, %v546
        %v548 = vsel %vm271, %v544, %v545
        %v549 = vsel %vm271, %v543, %v544
        %v550 = vsel %vm271, %v542, %v543
        %v551 = vsel %vm271, %v541, %v542
        %v552 = vsel %vm271, %v546, %v541
        %v553 = vadd.f32 %v535, %v551
        %v554 = vadd.f32 %v536, %v550
        %v555 = vadd.f32 %v537, %v549
        %v556 = vadd.f32 %v538, %v548
        %v557 = vadd.f32 %v539, %v547
        %v558 = vadd.f32 %v540, %v552
        %v559 = vrsqrt.pop %v553
        %v560 = vmul.f32 %v559, %v553
        %v561 = vmul.f32 %v560, %v559
        %v562 = vmul.f32 0.5, %v561
        %v563 = vsub.f32 1.5, %v562
        %v564 = vmul.f32 %v559, %v563
        %v565 = vmul.f32 %v553, %v564
        %vm566 = vcmp.eq.f32.partialorder %v553, inf
        %v567 = vsel %vm566, %v553, %v565
        %vm568 = vcmp.eq.f32.partialorder %v553, 0.0
        %v569 = vand.u32 %v553, 2147483648
        %v570 = vsel %vm568, %v569, %v567
        %v571 = vrsqrt.pop %v554
        %v572 = vmul.f32 %v571, %v554
        %v573 = vmul.f32 %v572, %v571
        %v574 = vmul.f32 0.5, %v573
        %v575 = vsub.f32 1.5, %v574
        %v576 = vmul.f32 %v571, %v575
        %v577 = vmul.f32 %v554, %v576
        %vm578 = vcmp.eq.f32.partialorder %v554, inf
        %v579 = vsel %vm578, %v554, %v577
        %vm580 = vcmp.eq.f32.partialorder %v554, 0.0
        %v581 = vand.u32 %v554, 2147483648
        %v582 = vsel %vm580, %v581, %v579
        %v583 = vrsqrt.pop %v555
        %v584 = vmul.f32 %v583, %v555
        %v585 = vmul.f32 %v584, %v583
        %v586 = vmul.f32 0.5, %v585
        %v587 = vsub.f32 1.5, %v586
        %v588 = vmul.f32 %v583, %v587
        %v589 = vmul.f32 %v555, %v588
        %vm590 = vcmp.eq.f32.partialorder %v555, inf
        %v591 = vsel %vm590, %v555, %v589
        %vm592 = vcmp.eq.f32.partialorder %v555, 0.0
        %v593 = vand.u32 %v555, 2147483648
        %v594 = vsel %vm592, %v593, %v591
        %v595 = vrsqrt.pop %v556
        %v596 = vmul.f32 %v595, %v556
        %v597 = vmul.f32 %v596, %v595
        %v598 = vmul.f32 0.5, %v597
        %v599 = vsub.f32 1.5, %v598
        %v600 = vmul.f32 %v595, %v599
        %v601 = vmul.f32 %v556, %v600
        %vm602 = vcmp.eq.f32.partialorder %v556, inf
        %v603 = vsel %vm602, %v556, %v601
        %vm604 = vcmp.eq.f32.partialorder %v556, 0.0
        %v605 = vand.u32 %v556, 2147483648
        %v606 = vsel %vm604, %v605, %v603
        %v607 = vrsqrt.pop %v557
        %v608 = vmul.f32 %v607, %v557
        %v609 = vmul.f32 %v608, %v607
        %v610 = vmul.f32 0.5, %v609
        %v611 = vsub.f32 1.5, %v610
        %v612 = vmul.f32 %v607, %v611
        %v613 = vmul.f32 %v557, %v612
        %vm614 = vcmp.eq.f32.partialorder %v557, inf
        %v615 = vsel %vm614, %v557, %v613
        %vm616 = vcmp.eq.f32.partialorder %v557, 0.0
        %v617 = vand.u32 %v557, 2147483648
        %v618 = vsel %vm616, %v617, %v615
        %v619 = vrsqrt.pop %v558
        %v620 = vmul.f32 %v619, %v558
        %v621 = vmul.f32 %v620, %v619
        %v622 = vmul.f32 0.5, %v621
        %v623 = vsub.f32 1.5, %v622
        %v624 = vmul.f32 %v619, %v623
        %v625 = vmul.f32 %v558, %v624
        %vm626 = vcmp.eq.f32.partialorder %v558, inf
        %v627 = vsel %vm626, %v558, %v625
        %vm628 = vcmp.eq.f32.partialorder %v558, 0.0
        %v629 = vand.u32 %v558, 2147483648
        %v630 = vsel %vm628, %v629, %v627
        %v631 = vadd.f32 %v570, 1e-06
        %v632 = vadd.f32 %v582, 1e-06
        %v633 = vadd.f32 %v594, 1e-06
        %v634 = vadd.f32 %v606, 1e-06
        %v635 = vadd.f32 %v618, 1e-06
        %v636 = vadd.f32 %v630, 1e-06
        %v637 = vadd.f32 %v631, %v632
        %v638 = vadd.f32 %v637, %v633
        %v639 = vadd.f32 %v638, %v634
        %v640 = vadd.f32 %v639, %v635
        %v641 = vadd.f32 %v640, %v636
        %v642 = vrot.slane %v641, 4
        %v643 = vadd.f32 %v641, %v642
        %v644 = vrot.slane %v643, 2
        %v645 = vadd.f32 %v643, %v644
        %v646 = vrot.slane %v645, 1
        %v647 = vadd.f32 %v645, %v646
        %v648 = vrcp.pop 48.0
        %v649 = vmul.f32 48.0, %v648
        %v650 = vsub.f32 1.0, %v649
        %v651 = vmul.f32 %v648, %v650
        %v652 = vadd.f32 %v648, %v651
        %vm653 = vweird.f32 %v648
        %v654 = vsel %vm653, %v648, %v652
        %v655 = vmul.f32 %v647, %v654
        %v656 = vmul.f32 %v631, %v631
        %v657 = vmul.f32 %v632, %v632
        %v658 = vmul.f32 %v633, %v633
        %v659 = vmul.f32 %v634, %v634
        %v660 = vmul.f32 %v635, %v635
        %v661 = vmul.f32 %v636, %v636
        %v662 = vadd.f32 %v656, %v657
        %v663 = vadd.f32 %v662, %v658
        %v664 = vadd.f32 %v663, %v659
        %v665 = vadd.f32 %v664, %v660
        %v666 = vadd.f32 %v665, %v661
        %v667 = vrot.slane %v666, 4
        %v668 = vadd.f32 %v666, %v667
        %v669 = vrot.slane %v668, 2
        %v670 = vadd.f32 %v668, %v669
        %v671 = vrot.slane %v670, 1
        %v672 = vadd.f32 %v670, %v671
        %v673 = vmul.f32 %v672, %v654
        %v674 = vmul.f32 %v655, %v655
        %v675 = vsub.f32 %v673, %v674
        %v676 = vmax.f32 %v675, 0.0
        %v677 = vadd.f32 %v676, 1e-05
        %v678 = vrsqrt.pop %v677
        %v679 = vmul.f32 %v678, %v677
        %v680 = vmul.f32 %v679, %v678
        %v681 = vmul.f32 0.5, %v680
        %v682 = vsub.f32 1.5, %v681
        %v683 = vmul.f32 %v678, %v682
        %vm684 = vweird.f32 %v677
        %vm685 = vweird.f32 %v678
        %vm686 = vmor %vm684, %vm685
        %v687 = vsel %vm686, %v678, %v683
        %v688 = vsub.f32 %v631, %v655
        %v689 = vsub.f32 %v632, %v655
        %v690 = vsub.f32 %v633, %v655
        %v691 = vsub.f32 %v634, %v655
        %v692 = vsub.f32 %v635, %v655
        %v693 = vsub.f32 %v636, %v655
        %v694 = vmul.f32 %v688, %v687
        %v695 = vmul.f32 %v689, %v687
        %v696 = vmul.f32 %v690, %v687
        %v697 = vmul.f32 %v691, %v687
        %v698 = vmul.f32 %v692, %v687
        %v699 = vmul.f32 %v693, %v687
        %v700 = vld [vmem:[%s1] sm:$0xff]
        %v701 = vld [vmem:[%s1 + $0x8] sm:$0xff]
        %v702 = vld [vmem:[%s1 + $0x10] sm:$0xff]
        %v703 = vld [vmem:[%s1 + $0x18] sm:$0xff]
        %v704 = vld [vmem:[%s1 + $0x20] sm:$0xff]
        %v705 = vld [vmem:[%s1 + $0x28] sm:$0xff]
        %707 = vset.pattern.permute.xlu0 0
        %708 = vperm.xlu0 %707, %v700
        %v709 = vpop.permute.xlu0 %708
        %712 = vset.pattern.permute.xlu0 0
        %713 = vperm.xlu0 %712, %v701
        %v714 = vpop.permute.xlu0 %713
        %717 = vset.pattern.permute.xlu0 0
        %718 = vperm.xlu0 %717, %v702
        %v719 = vpop.permute.xlu0 %718
        %722 = vset.pattern.permute.xlu0 0
        %723 = vperm.xlu0 %722, %v703
        %v724 = vpop.permute.xlu0 %723
        %727 = vset.pattern.permute.xlu0 0
        %728 = vperm.xlu0 %727, %v704
        %v729 = vpop.permute.xlu0 %728
        %732 = vset.pattern.permute.xlu0 0
        %733 = vperm.xlu0 %732, %v705
        %v734 = vpop.permute.xlu0 %733
        %v736 = vmul.f32 %v694, %v709
        %v737 = vmul.f32 %v695, %v714
        %v738 = vmul.f32 %v696, %v719
        %v739 = vmul.f32 %v697, %v724
        %v740 = vmul.f32 %v698, %v729
        %v741 = vmul.f32 %v699, %v734
        %v742 = vld [vmem:[%s2] sm:$0xff]
        %v743 = vld [vmem:[%s2 + $0x8] sm:$0xff]
        %v744 = vld [vmem:[%s2 + $0x10] sm:$0xff]
        %v745 = vld [vmem:[%s2 + $0x18] sm:$0xff]
        %v746 = vld [vmem:[%s2 + $0x20] sm:$0xff]
        %v747 = vld [vmem:[%s2 + $0x28] sm:$0xff]
        %749 = vset.pattern.permute.xlu0 0
        %750 = vperm.xlu0 %749, %v742
        %v751 = vpop.permute.xlu0 %750
        %754 = vset.pattern.permute.xlu0 0
        %755 = vperm.xlu0 %754, %v743
        %v756 = vpop.permute.xlu0 %755
        %759 = vset.pattern.permute.xlu0 0
        %760 = vperm.xlu0 %759, %v744
        %v761 = vpop.permute.xlu0 %760
        %764 = vset.pattern.permute.xlu0 0
        %765 = vperm.xlu0 %764, %v745
        %v766 = vpop.permute.xlu0 %765
        %769 = vset.pattern.permute.xlu0 0
        %770 = vperm.xlu0 %769, %v746
        %v771 = vpop.permute.xlu0 %770
        %774 = vset.pattern.permute.xlu0 0
        %775 = vperm.xlu0 %774, %v747
        %v776 = vpop.permute.xlu0 %775
        %v778 = vadd.f32 %v736, %v751
        %v779 = vadd.f32 %v737, %v756
        %v780 = vadd.f32 %v738, %v761
        %v781 = vadd.f32 %v739, %v766
        %v782 = vadd.f32 %v740, %v771
        %v783 = vadd.f32 %v741, %v776
        %v784 = vrcp.pop %v631
        %v785 = vmul.f32 %v631, %v784
        %v786 = vsub.f32 1.0, %v785
        %v787 = vmul.f32 %v784, %v786
        %v788 = vadd.f32 %v784, %v787
        %vm789 = vweird.f32 %v631
        %vm790 = vweird.f32 %v784
        %vm791 = vmor %vm789, %vm790
        %v792 = vsel %vm791, %v784, %v788
        %v793 = vand.u32 2147483647, %v631
        %vm794 = vcmp.eq.f32.partialorder %v793, 8.507059e+37
        %v795 = vand.u32 %v631, 2147483648
        %v796 = vor.u32 1.1754944e-38, %v795
        %v797 = vsel %vm794, %v796, %v792
        %v798 = vmul.f32 %v778, %v797
        %v799 = vrcp.pop %v632
        %v800 = vmul.f32 %v632, %v799
        %v801 = vsub.f32 1.0, %v800
        %v802 = vmul.f32 %v799, %v801
        %v803 = vadd.f32 %v799, %v802
        %vm804 = vweird.f32 %v632
        %vm805 = vweird.f32 %v799
        %vm806 = vmor %vm804, %vm805
        %v807 = vsel %vm806, %v799, %v803
        %v808 = vand.u32 2147483647, %v632
        %vm809 = vcmp.eq.f32.partialorder %v808, 8.507059e+37
        %v810 = vand.u32 %v632, 2147483648
        %v811 = vor.u32 1.1754944e-38, %v810
        %v812 = vsel %vm809, %v811, %v807
        %v813 = vmul.f32 %v779, %v812
        %v814 = vrcp.pop %v633
        %v815 = vmul.f32 %v633, %v814
        %v816 = vsub.f32 1.0, %v815
        %v817 = vmul.f32 %v814, %v816
        %v818 = vadd.f32 %v814, %v817
        %vm819 = vweird.f32 %v633
        %vm820 = vweird.f32 %v814
        %vm821 = vmor %vm819, %vm820
        %v822 = vsel %vm821, %v814, %v818
        %v823 = vand.u32 2147483647, %v633
        %vm824 = vcmp.eq.f32.partialorder %v823, 8.507059e+37
        %v825 = vand.u32 %v633, 2147483648
        %v826 = vor.u32 1.1754944e-38, %v825
        %v827 = vsel %vm824, %v826, %v822
        %v828 = vmul.f32 %v780, %v827
        %v829 = vrcp.pop %v634
        %v830 = vmul.f32 %v634, %v829
        %v831 = vsub.f32 1.0, %v830
        %v832 = vmul.f32 %v829, %v831
        %v833 = vadd.f32 %v829, %v832
        %vm834 = vweird.f32 %v634
        %vm835 = vweird.f32 %v829
        %vm836 = vmor %vm834, %vm835
        %v837 = vsel %vm836, %v829, %v833
        %v838 = vand.u32 2147483647, %v634
        %vm839 = vcmp.eq.f32.partialorder %v838, 8.507059e+37
        %v840 = vand.u32 %v634, 2147483648
        %v841 = vor.u32 1.1754944e-38, %v840
        %v842 = vsel %vm839, %v841, %v837
        %v843 = vmul.f32 %v781, %v842
        %v844 = vrcp.pop %v635
        %v845 = vmul.f32 %v635, %v844
        %v846 = vsub.f32 1.0, %v845
        %v847 = vmul.f32 %v844, %v846
        %v848 = vadd.f32 %v844, %v847
        %vm849 = vweird.f32 %v635
        %vm850 = vweird.f32 %v844
        %vm851 = vmor %vm849, %vm850
        %v852 = vsel %vm851, %v844, %v848
        %v853 = vand.u32 2147483647, %v635
        %vm854 = vcmp.eq.f32.partialorder %v853, 8.507059e+37
        %v855 = vand.u32 %v635, 2147483648
        %v856 = vor.u32 1.1754944e-38, %v855
        %v857 = vsel %vm854, %v856, %v852
        %v858 = vmul.f32 %v782, %v857
        %v859 = vrcp.pop %v636
        %v860 = vmul.f32 %v636, %v859
        %v861 = vsub.f32 1.0, %v860
        %v862 = vmul.f32 %v859, %v861
        %v863 = vadd.f32 %v859, %v862
        %vm864 = vweird.f32 %v636
        %vm865 = vweird.f32 %v859
        %vm866 = vmor %vm864, %vm865
        %v867 = vsel %vm866, %v859, %v863
        %v868 = vand.u32 2147483647, %v636
        %vm869 = vcmp.eq.f32.partialorder %v868, 8.507059e+37
        %v870 = vand.u32 %v636, 2147483648
        %v871 = vor.u32 1.1754944e-38, %v870
        %v872 = vsel %vm869, %v871, %v867
        %v873 = vmul.f32 %v783, %v872
        %v874 = vmul.f32 %v238, %v798
        %v875 = vmul.f32 %v239, %v813
        %v876 = vmul.f32 %v240, %v828
        %v877 = vmul.f32 %v241, %v843
        %v878 = vmul.f32 %v242, %v858
        %v879 = vmul.f32 %v243, %v873
        %880 = vst [vmem:[%s237] sm:$0xff] %v874
        %881 = vst [vmem:[%s237 + $0x8] sm:$0xff] %v875
        %882 = vst [vmem:[%s237 + $0x10] sm:$0xff] %v876
        %883 = vst [vmem:[%s237 + $0x18] sm:$0xff] %v877
        %884 = vst [vmem:[%s237 + $0x20] sm:$0xff] %v878
        %885 = vst [vmem:[%s237 + $0x28] sm:$0xff] %v879
        %s886 = sand.u32 %s106, 1
        %s887 = sand.u32 %s106, 1
        %s888 = smul.addr %s887, 48
        %s889 = scalar_lea.vmem [#allocation3], %s888
        // Predicated region
        $region71: #{vn_layer_norm.1} parent=65 // pred_check
          %p890 = pneg %p116
        $region72: #{vn_layer_norm.1} parent=65 // pred_check_branch
          %892 = sbr.rel (%p890) target = $region74
        $region73: #{vn_layer_norm.1} parent=65 // pred_region
          %s893 = smul.addr %s18, 12
          %s894 = sadd.s32 %s19, %s893
          %s895 = smul.addr %s894, 8
          %s896 = scalar_lea.vmem %s3, %s895
          // Predicated region
          $region75: #{vn_layer_norm.1} parent=73 // pred_check
            _
          $region76: #{vn_layer_norm.1} parent=73 // pred_check_branch
            %898 = sbr.rel (0) target = $region78
          $region77: #{vn_layer_norm.1} parent=73 // pred_region
            // Predicated region
            $region79: #{vn_layer_norm.1} parent=77 // pred_check
              _
            $region80: #{vn_layer_norm.1} parent=77 // pred_check_branch
              %900 = sbr.rel (0) target = $region82
            $region81: #{vn_layer_norm.1} parent=77 // pred_region
              // Predicated region
              $region94: #{vn_layer_norm.1} parent=81 // pred_check
                _
              $region95: #{vn_layer_norm.1} parent=81 // pred_check_branch
                %926 = sbr.rel (0) target = $region97
              $region96: #{vn_layer_norm.1} parent=81 // pred_region
                loop: start=0, step=1, limit=1
                $region98: #{vn_layer_norm.1} parent=96 // loop_pre_header
                  _
                $region99: #{vn_layer_norm.1} parent=96 // loop_header
                  %s928 = sphi 0, %s932
                  %p929 = scmp.ge.s32.totalorder %s928, 1
                  %s933 = sphi %s889, %s889
                  %s934 = sphi %s896, %s896
                $region100: #{vn_layer_norm.1} parent=96 // loop_header_branch
                  %931 = sbr.rel (%p929) target = $region104
                $region101: #{vn_layer_norm.1} parent=96 // loop_body
                  %v935 = vld [vmem:[%s933] sm:$0xff]
                  %936 = vst [vmem:[%s934] sm:$0xff] %v935
                  %v937 = vld [vmem:[%s933 + $0x8] sm:$0xff]
                  %938 = vst [vmem:[%s934 + $0x10] sm:$0xff] %v937
                  %v939 = vld [vmem:[%s933 + $0x10] sm:$0xff]
                  %940 = vst [vmem:[%s934 + $0x20] sm:$0xff] %v939
                  %v941 = vld [vmem:[%s933 + $0x18] sm:$0xff]
                  %942 = vst [vmem:[%s934 + $0x30] sm:$0xff] %v941
                  %v943 = vld [vmem:[%s933 + $0x20] sm:$0xff]
                  %944 = vst [vmem:[%s934 + $0x40] sm:$0xff] %v943
                  %v945 = vld [vmem:[%s933 + $0x28] sm:$0xff]
                  %946 = vst [vmem:[%s934 + $0x50] sm:$0xff] %v945
                $region102: #{vn_layer_norm.1} parent=96 // loop_footer
                  %s932 = sadd.s32 1, %s928
                $region103: #{vn_layer_norm.1} parent=96 // loop_footer_branch
                  %927 = sbr.rel target = $region99
                $region104: #{vn_layer_norm.1} parent=96 // loop_exit
                  _
              $region97: #{vn_layer_norm.1} parent=81 // pred_fallthru
                _
              // Predicated region
              $region105: #{vn_layer_norm.1} parent=81 // pred_check
                _
              $region106: #{vn_layer_norm.1} parent=81 // pred_check_branch
                %948 = sbr.rel target = $region108
              $region107: #{vn_layer_norm.1} parent=81 // pred_region
                _
              $region108: #{vn_layer_norm.1} parent=81 // pred_fallthru
                _
            $region82: #{vn_layer_norm.1} parent=77 // pred_fallthru
              _
            // Predicated region
            $region83: #{vn_layer_norm.1} parent=77 // pred_check
              _
            $region84: #{vn_layer_norm.1} parent=77 // pred_check_branch
              %902 = sbr.rel target = $region86
            $region85: #{vn_layer_norm.1} parent=77 // pred_region
              %s904 = ssub.s32 256, 1
              loop: start=0, step=1, limit=1
              $region87: #{vn_layer_norm.1} parent=85 // loop_pre_header
                _
              $region88: #{vn_layer_norm.1} parent=85 // loop_header
                %s906 = sphi 0, %s910
                %p907 = scmp.ge.s32.totalorder %s906, 1
                %s911 = sphi %s889, %s889
                %s912 = sphi %s896, %s896
              $region89: #{vn_layer_norm.1} parent=85 // loop_header_branch
                %909 = sbr.rel (%p907) target = $region93
              $region90: #{vn_layer_norm.1} parent=85 // loop_body
                %v913 = vld [vmem:[%s911] sm:%s904]
                %914 = vst [vmem:[%s912] sm:%s904] %v913
                %v915 = vld [vmem:[%s911 + $0x8] sm:%s904]
                %916 = vst [vmem:[%s912 + $0x10] sm:%s904] %v915
                %v917 = vld [vmem:[%s911 + $0x10] sm:%s904]
                %918 = vst [vmem:[%s912 + $0x20] sm:%s904] %v917
                %v919 = vld [vmem:[%s911 + $0x18] sm:%s904]
                %920 = vst [vmem:[%s912 + $0x30] sm:%s904] %v919
                %v921 = vld [vmem:[%s911 + $0x20] sm:%s904]
                %922 = vst [vmem:[%s912 + $0x40] sm:%s904] %v921
                %v923 = vld [vmem:[%s911 + $0x28] sm:%s904]
                %924 = vst [vmem:[%s912 + $0x50] sm:%s904] %v923
              $region91: #{vn_layer_norm.1} parent=85 // loop_footer
                %s910 = sadd.s32 1, %s906
              $region92: #{vn_layer_norm.1} parent=85 // loop_footer_branch
                %905 = sbr.rel target = $region88
              $region93: #{vn_layer_norm.1} parent=85 // loop_exit
                _
            $region86: #{vn_layer_norm.1} parent=77 // pred_fallthru
              _
          $region78: #{vn_layer_norm.1} parent=73 // pred_fallthru
            _
          %949 = vnop
        $region74: #{vn_layer_norm.1} parent=65 // pred_fallthru
          _
      $region66: #{vn_layer_norm.1} parent=5 // pred_fallthru
        _
      %p950 = scmp.le.s32.totalorder 2, %s9
      // Predicated region
      $region109: #{vn_layer_norm.1} parent=5 // pred_check
        %p951 = pneg %p950
      $region110: #{vn_layer_norm.1} parent=5 // pred_check_branch
        %953 = sbr.rel (%p951) target = $region112
      $region111: #{vn_layer_norm.1} parent=5 // pred_region
        %s954 = ssub.s32 %s9, 2
        // Predicated region
        $region113: #{vn_layer_norm.1} parent=111 // pred_check
          %p955 = pneg %p122
        $region114: #{vn_layer_norm.1} parent=111 // pred_check_branch
          %957 = sbr.rel (%p955) target = $region116
        $region115: #{vn_layer_norm.1} parent=111 // pred_region
          %s958 = sand.u32 %s107, 1
          %s959 = sand.u32 %s107, 1
          %s960 = smul.addr %s959, 48
          %s961 = scalar_lea.vmem [#allocation3], %s960
        $region116: #{vn_layer_norm.1} parent=111 // pred_fallthru
          _
      $region112: #{vn_layer_norm.1} parent=5 // pred_fallthru
        _
    $region6: #{vn_layer_norm.1} parent=1 // loop_footer
      %s13 = sadd.s32 1, %s9
    $region7: #{vn_layer_norm.1} parent=1 // loop_footer_branch
      %8 = sbr.rel target = $region3
    $region8: #{vn_layer_norm.1} parent=1 // loop_exit
      _

</llo_original>
